<compile_context>
chip_gen: v5e
topology: v5e:2x2
jax: 0.10.0
libtpu: 0.0.40
codegen_flags: <defaults>
</compile_context>

<pallas_src>
import functools

import jax
import jax.numpy as jnp
from jax.experimental import pallas as pl
from jax.experimental.pallas import tpu as pltpu


def _round_up(n, m):
    return ((n + m - 1) // m) * m


def mlp_kernel(xt_ref, w1_ref, b1_ref, w2_ref, b2_ref, w3_ref, b3_ref, ot_ref):
    # xt_ref : (in_dim, block_b)   streamed activation tile (batch on lanes)
    # wN_ref : (out_f, in_f)       PyTorch nn.Linear layout, VMEM-resident
    # bN_ref : (out_f, 1)          broadcasts over the lane (batch) axis
    # ot_ref : (num_classes, block_b)
    xt = xt_ref[...]
    h1 = jnp.dot(w1_ref[...], xt, preferred_element_type=jnp.float32) + b1_ref[...]
    h1 = jnp.maximum(h1, 0.0)
    h2 = jnp.dot(w2_ref[...], h1, preferred_element_type=jnp.float32) + b2_ref[...]
    h2 = jnp.maximum(h2, 0.0)
    o = jnp.dot(w3_ref[...], h2, preferred_element_type=jnp.float32) + b3_ref[...]
    ot_ref[...] = o.astype(ot_ref.dtype)


def _choose_block_b(b_pad, requested):
    """Pick a lane-dense batch tile: multiple of 128 that divides b_pad."""
    bb = min(_round_up(requested, 128), b_pad)
    # For large batches keep >= 4 grid steps so the "parallel" batch axis gives
    # each of v7x's two TensorCores at least one compute + one prefetch step.
    if b_pad // bb < 4 and b_pad >= 4 * 2048:
        bb = _round_up(b_pad // 4, 128)
    while b_pad % bb:           # both are multiples of 128 -> terminates at 128
        bb -= 128
    return bb


def _vmem_limit_bytes(block_b, in_dim, h1_dim, h2_dim, out_dim):
    """Explicit scoped-VMEM budget: double-buffered x/out tiles + h1/h2 temps +
    weights, with 2x margin; >= 32 MiB (v5e defaults to 16 MiB) and < v7x's 64 MiB."""
    pad8 = lambda n: _round_up(n, 8)
    per_lane = 4 * (2 * pad8(in_dim) + 2 * pad8(out_dim) + pad8(h1_dim) + pad8(h2_dim))
    weights = 2 * 4 * (h1_dim * in_dim + h2_dim * h1_dim + out_dim * h2_dim
                       + h1_dim + h2_dim + out_dim)
    need = per_lane * block_b + weights
    return int(min(max(2 * need, 32 * 1024 * 1024), 56 * 1024 * 1024))


@functools.partial(jax.jit, static_argnames=("block_b",))
def mlp_forward_fb(x_fb, w1, b1, w2, b2, w3, b3, *, block_b=8192):
    """Preferred features-first interface (zero layout copies around the kernel).

    x_fb: (in_dim, B) with B a multiple of 128.  wN: (out_f, in_f) PyTorch layout.
    bN: (out_f,).  Returns (num_classes, B).
    """
    in_dim, B = x_fb.shape
    h1_dim = w1.shape[0]
    h2_dim = w2.shape[0]
    out_dim = w3.shape[0]
    if B % 128 != 0:
        raise ValueError("mlp_forward_fb requires batch (last axis) % 128 == 0; "
                         "use mlp_forward for arbitrary batch sizes.")

    bb = _choose_block_b(B, block_b)
    grid = (B // bb,)

    b1c = b1.reshape(h1_dim, 1)
    b2c = b2.reshape(h2_dim, 1)
    b3c = b3.reshape(out_dim, 1)

    # Constant index_map -> weights/biases resident in VMEM across the grid.
    full = lambda shape: pl.BlockSpec(shape, lambda i: (0,) * len(shape))

    ce = pl.CostEstimate(
        flops=2 * B * (in_dim * h1_dim + h1_dim * h2_dim + h2_dim * out_dim),
        transcendentals=0,
        bytes_accessed=4 * (x_fb.size + B * out_dim
                            + w1.size + w2.size + w3.size
                            + h1_dim + h2_dim + out_dim),
    )

    return pl.pallas_call(
        mlp_kernel,
        out_shape=jax.ShapeDtypeStruct((out_dim, B), x_fb.dtype),
        grid_spec=pltpu.PrefetchScalarGridSpec(
            num_scalar_prefetch=0,
            grid=grid,
            in_specs=[
                pl.BlockSpec((in_dim, bb), lambda i: (0, i)),   # x tile (streamed)
                full((h1_dim, in_dim)),    # w1
                full((h1_dim, 1)),         # b1
                full((h2_dim, h1_dim)),    # w2
                full((h2_dim, 1)),         # b2
                full((out_dim, h2_dim)),   # w3
                full((out_dim, 1)),        # b3
            ],
            out_specs=pl.BlockSpec((out_dim, bb), lambda i: (0, i)),
        ),
        compiler_params=pltpu.CompilerParams(
            dimension_semantics=("parallel",),  # batch grid shards across TCs (v7x)
            vmem_limit_bytes=_vmem_limit_bytes(bb, in_dim, h1_dim, h2_dim, out_dim),
        ),
        cost_estimate=ce,
    )(x_fb, w1, b1c, w2, b2c, w3, b3c)


@functools.partial(jax.jit, static_argnames=("block_b",))
def mlp_forward(x, w1, b1, w2, b2, w3, b3, *, block_b=8192):
    """PyTorch MLP.forward interface: x (B, in_dim) -> (B, num_classes).

    NOTE: the transpose (+ pad to a multiple of 128) around the features-first
    core roughly doubles end-to-end HBM traffic for this memory/overhead-bound
    kernel.  Prefer mlp_forward_fb and keep activations (features, batch)
    end-to-end when the surrounding pipeline allows it.
    """
    B, in_dim = x.shape
    b_pad = _round_up(max(B, 128), 128)
    if b_pad == B:
        x_fb = x.T
    else:
        x_fb = jnp.zeros((in_dim, b_pad), x.dtype).at[:, :B].set(x.T)
    out_fb = mlp_forward_fb(x_fb, w1, b1, w2, b2, w3, b3, block_b=block_b)
    return out_fb[:, :B].T


def init_linear(kw, kb, fan_in, fan_out, dtype=jnp.float32):
    # nn.Linear default init U(-1/sqrt(fan_in), 1/sqrt(fan_in)); PyTorch layout (out, in).
    bound = 1.0 / (fan_in ** 0.5)
    w = jax.random.uniform(kw, (fan_out, fan_in), dtype, minval=-bound, maxval=bound)
    b = jax.random.uniform(kb, (fan_out,), dtype, minval=-bound, maxval=bound)
    return w, b


if __name__ == "__main__":
    input_size = 4
    num_classes = 3
    batch = 512          # small demo batch; block tile clips to 512 (lane-dense)

    key = jax.random.PRNGKey(0)
    kx, kx2, k1w, k1b, k2w, k2b, k3w, k3b = jax.random.split(key, 8)

    w1, b1 = init_linear(k1w, k1b, input_size, 64)
    w2, b2 = init_linear(k2w, k2b, 64, 32)
    w3, b3 = init_linear(k3w, k3b, 32, num_classes)

    def ref_mlp(x):
        h = jnp.maximum(x @ w1.T + b1, 0.0)
        h = jnp.maximum(h @ w2.T + b2, 0.0)
        return h @ w3.T + b3

    # 1) Preferred features-first path: no layout copies around the kernel.
    x_fb = jax.random.normal(kx, (input_size, batch), jnp.float32)
    out_fb = mlp_forward_fb(x_fb, w1, b1, w2, b2, w3, b3)
    jax.block_until_ready(out_fb)
    ref_fb = ref_mlp(x_fb.T).T
    assert out_fb.shape == (num_classes, batch)
    assert jnp.allclose(out_fb, ref_fb, atol=1e-5, rtol=1e-5), \
        float(jnp.max(jnp.abs(out_fb - ref_fb)))

    # 2) PyTorch-interface (B, F) wrapper with a batch that is NOT a multiple of
    #    128, to exercise the pad path (kernel tiles stay lane-dense internally).
    x2 = jax.random.normal(kx2, (300, input_size), jnp.float32)
    out2 = mlp_forward(x2, w1, b1, w2, b2, w3, b3)
    jax.block_until_ready(out2)
    ref2 = ref_mlp(x2)
    assert out2.shape == (300, num_classes)
    assert jnp.allclose(out2, ref2, atol=1e-5, rtol=1e-5), \
        float(jnp.max(jnp.abs(out2 - ref2)))

    print("KERNEL_OK")
</pallas_src>

<mosaic_0001>
module attributes {stable_mosaic.version = 11 : i64} {
  func.func @mlp_kernel(%arg0: i32, %arg1: memref<4x512xf32, #tpu.memory_space<vmem>>, %arg2: memref<64x4xf32, #tpu.memory_space<vmem>>, %arg3: memref<64x1xf32, #tpu.memory_space<vmem>>, %arg4: memref<32x64xf32, #tpu.memory_space<vmem>>, %arg5: memref<32x1xf32, #tpu.memory_space<vmem>>, %arg6: memref<3x32xf32, #tpu.memory_space<vmem>>, %arg7: memref<3x1xf32, #tpu.memory_space<vmem>>, %arg8: memref<3x512xf32, #tpu.memory_space<vmem>>) attributes {dimension_semantics = [#tpu.dimension_semantics<parallel>], iteration_bounds = array<i64: 1>, scalar_prefetch = 0 : i64, scratch_operands = 0 : i64, tpu.core_type = #tpu.core_type<tc>, window_params = [{transform_indices = @transform_0, window_bounds = array<i64: 4, 512>}, {pipeline_mode = #tpu.pipeline_mode<synchronous>, transform_indices = @transform_1, window_bounds = array<i64: 64, 4>}, {pipeline_mode = #tpu.pipeline_mode<synchronous>, transform_indices = @transform_2, window_bounds = array<i64: 64, 1>}, {pipeline_mode = #tpu.pipeline_mode<synchronous>, transform_indices = @transform_3, window_bounds = array<i64: 32, 64>}, {pipeline_mode = #tpu.pipeline_mode<synchronous>, transform_indices = @transform_4, window_bounds = array<i64: 32, 1>}, {pipeline_mode = #tpu.pipeline_mode<synchronous>, transform_indices = @transform_5, window_bounds = array<i64: 3, 32>}, {pipeline_mode = #tpu.pipeline_mode<synchronous>, transform_indices = @transform_6, window_bounds = array<i64: 3, 1>}, {transform_indices = @transform_7, window_bounds = array<i64: 3, 512>}]} {
    %c0 = arith.constant 0 : index
    %c0_0 = arith.constant 0 : index
    %0 = vector.load %arg1[%c0, %c0_0] : memref<4x512xf32, #tpu.memory_space<vmem>>, vector<4x512xf32>
    %c0_1 = arith.constant 0 : index
    %c0_2 = arith.constant 0 : index
    %1 = vector.load %arg2[%c0_1, %c0_2] : memref<64x4xf32, #tpu.memory_space<vmem>>, vector<64x4xf32>
    %cst = arith.constant dense<0.000000e+00> : vector<64x512xf32>
    %2 = tpu.matmul %1, %0, %cst {dimension_numbers = #tpu.dot_dimension_numbers<[1], [0], [0], [1], [0, 0, 1, 1], [], []>} : vector<64x4xf32>, vector<4x512xf32>, vector<64x512xf32> -> vector<64x512xf32>
    %c0_3 = arith.constant 0 : index
    %c0_4 = arith.constant 0 : index
    %3 = vector.load %arg3[%c0_3, %c0_4] : memref<64x1xf32, #tpu.memory_space<vmem>>, vector<64x1xf32>
    %4 = vector.broadcast %3 : vector<64x1xf32> to vector<64x512xf32>
    %5 = arith.addf %2, %4 : vector<64x512xf32>
    %cst_5 = arith.constant 0.000000e+00 : f32
    %6 = vector.broadcast %cst_5 : f32 to vector<64x512xf32>
    %7 = arith.maximumf %5, %6 : vector<64x512xf32>
    %c0_6 = arith.constant 0 : index
    %c0_7 = arith.constant 0 : index
    %8 = vector.load %arg4[%c0_6, %c0_7] : memref<32x64xf32, #tpu.memory_space<vmem>>, vector<32x64xf32>
    %cst_8 = arith.constant dense<0.000000e+00> : vector<32x512xf32>
    %9 = tpu.matmul %8, %7, %cst_8 {dimension_numbers = #tpu.dot_dimension_numbers<[1], [0], [0], [1], [0, 0, 1, 1], [], []>} : vector<32x64xf32>, vector<64x512xf32>, vector<32x512xf32> -> vector<32x512xf32>
    %c0_9 = arith.constant 0 : index
    %c0_10 = arith.constant 0 : index
    %10 = vector.load %arg5[%c0_9, %c0_10] : memref<32x1xf32, #tpu.memory_space<vmem>>, vector<32x1xf32>
    %11 = vector.broadcast %10 : vector<32x1xf32> to vector<32x512xf32>
    %12 = arith.addf %9, %11 : vector<32x512xf32>
    %cst_11 = arith.constant 0.000000e+00 : f32
    %13 = vector.broadcast %cst_11 : f32 to vector<32x512xf32>
    %14 = arith.maximumf %12, %13 : vector<32x512xf32>
    %c0_12 = arith.constant 0 : index
    %c0_13 = arith.constant 0 : index
    %15 = vector.load %arg6[%c0_12, %c0_13] : memref<3x32xf32, #tpu.memory_space<vmem>>, vector<3x32xf32>
    %cst_14 = arith.constant dense<0.000000e+00> : vector<3x512xf32>
    %16 = tpu.matmul %15, %14, %cst_14 {dimension_numbers = #tpu.dot_dimension_numbers<[1], [0], [0], [1], [0, 0, 1, 1], [], []>} : vector<3x32xf32>, vector<32x512xf32>, vector<3x512xf32> -> vector<3x512xf32>
    %c0_15 = arith.constant 0 : index
    %c0_16 = arith.constant 0 : index
    %17 = vector.load %arg7[%c0_15, %c0_16] : memref<3x1xf32, #tpu.memory_space<vmem>>, vector<3x1xf32>
    %18 = vector.broadcast %17 : vector<3x1xf32> to vector<3x512xf32>
    %19 = arith.addf %16, %18 : vector<3x512xf32>
    %c0_17 = arith.constant 0 : index
    %c0_18 = arith.constant 0 : index
    %20 = vector.load %arg8[%c0_17, %c0_18] : memref<3x512xf32, #tpu.memory_space<vmem>>, vector<3x512xf32>
    tpu.vector_store %arg8[%c0_17, %c0_18], %19 {strides = array<i32>} : memref<3x512xf32, #tpu.memory_space<vmem>>, vector<3x512xf32>,
    return
  }
  func.func @transform_0(%arg0: i32) -> (i32, i32) {
    %c0_i32 = arith.constant 0 : i32
    %c0_i32_0 = arith.constant 0 : i32
    return %c0_i32, %arg0 : i32, i32
  }
  func.func @transform_1(%arg0: i32) -> (i32, i32) {
    %c0_i32 = arith.constant 0 : i32
    %c0_i32_0 = arith.constant 0 : i32
    %c0_i32_1 = arith.constant 0 : i32
    return %c0_i32, %c0_i32_0 : i32, i32
  }
  func.func @transform_2(%arg0: i32) -> (i32, i32) {
    %c0_i32 = arith.constant 0 : i32
    %c0_i32_0 = arith.constant 0 : i32
    %c0_i32_1 = arith.constant 0 : i32
    return %c0_i32, %c0_i32_0 : i32, i32
  }
  func.func @transform_3(%arg0: i32) -> (i32, i32) {
    %c0_i32 = arith.constant 0 : i32
    %c0_i32_0 = arith.constant 0 : i32
    %c0_i32_1 = arith.constant 0 : i32
    return %c0_i32, %c0_i32_0 : i32, i32
  }
  func.func @transform_4(%arg0: i32) -> (i32, i32) {
    %c0_i32 = arith.constant 0 : i32
    %c0_i32_0 = arith.constant 0 : i32
    %c0_i32_1 = arith.constant 0 : i32
    return %c0_i32, %c0_i32_0 : i32, i32
  }
  func.func @transform_5(%arg0: i32) -> (i32, i32) {
    %c0_i32 = arith.constant 0 : i32
    %c0_i32_0 = arith.constant 0 : i32
    %c0_i32_1 = arith.constant 0 : i32
    return %c0_i32, %c0_i32_0 : i32, i32
  }
  func.func @transform_6(%arg0: i32) -> (i32, i32) {
    %c0_i32 = arith.constant 0 : i32
    %c0_i32_0 = arith.constant 0 : i32
    %c0_i32_1 = arith.constant 0 : i32
    return %c0_i32, %c0_i32_0 : i32, i32
  }
  func.func @transform_7(%arg0: i32) -> (i32, i32) {
    %c0_i32 = arith.constant 0 : i32
    %c0_i32_0 = arith.constant 0 : i32
    return %c0_i32, %arg0 : i32, i32
  }
}

</mosaic_0001>

<llo_original>
// kernel: mlp_forward_fb.1
$region0: #{mlp_forward_fb.1}
  #allocation0 [shape = 'u32[]', space=smem, size = 0x4, offset = 0x4, fixed_abs, tag = 'smem constant byte address 0x4 - core index']
  #allocation1 [shape = 'u32[72,128]{1,0:T(1,128)}', space=vmem, size = 0x9000, scoped, tag = 'internal scratch']
  %s0 = inlined_call_operand.vmem [shape: f32[4,512], index: 0, kind: input, shape index: {}]
  %s1 = inlined_call_operand.vmem [shape: f32[64,4], index: 1, kind: input, shape index: {}]
  %s2 = inlined_call_operand.vmem [shape: f32[64,1], index: 2, kind: input, shape index: {}]
  %s3 = inlined_call_operand.vmem [shape: f32[32,64], index: 3, kind: input, shape index: {}]
  %s4 = inlined_call_operand.vmem [shape: f32[32,1], index: 4, kind: input, shape index: {}]
  %s5 = inlined_call_operand.vmem [shape: f32[3,32], index: 5, kind: input, shape index: {}]
  %s6 = inlined_call_operand.vmem [shape: f32[3,1], index: 6, kind: input, shape index: {}]
  %s7 = inlined_call_operand.hbm [shape: f32[3,512], index: 7, kind: output, shape index: {}]
  %s8 = sld [smem:[#allocation0]]
  $region38: #{mlp_forward_fb.1} parent=0
    _
  %s10 = ssub.s32 1, %s8
  %s11 = scalar_select 0, %s10, %s8
  $region1: #{mlp_forward_fb.1} parent=0
    #allocation2 [shape = 'u8[8192]{0}', space=vmem, size = 0x2000, scoped, tag = 'output window, operand 0, single buffered']
    #allocation3 [shape = 's32[1]{0}', space=sflag, size = 0x4, scoped, tag = 'scoped memory for mlp_forward_fb.1']
    %12 = vsyncpa [#allocation3], 0
    // Predicated region
    $region2: #{mlp_forward_fb.1} parent=1 // pred_check
      _
    $region3: #{mlp_forward_fb.1} parent=1 // pred_check_branch
      %14 = sbr.rel (0) target = $region5
    $region4: #{mlp_forward_fb.1} parent=1 // pred_region
      _
    $region5: #{mlp_forward_fb.1} parent=1 // pred_fallthru
      _
    // Predicated region
    $region6: #{mlp_forward_fb.1} parent=1 // pred_check
      _
    $region7: #{mlp_forward_fb.1} parent=1 // pred_check_branch
      %16 = sbr.rel (0) target = $region9
    $region8: #{mlp_forward_fb.1} parent=1 // pred_region
      _
    $region9: #{mlp_forward_fb.1} parent=1 // pred_fallthru
      _
    // Predicated region
    $region10: #{mlp_forward_fb.1} parent=1 // pred_check
      _
    $region11: #{mlp_forward_fb.1} parent=1 // pred_check_branch
      %18 = sbr.rel (0) target = $region13
    $region12: #{mlp_forward_fb.1} parent=1 // pred_region
      _
    $region13: #{mlp_forward_fb.1} parent=1 // pred_fallthru
      _
    // Predicated region
    $region14: #{mlp_forward_fb.1} parent=1 // pred_check
      _
    $region15: #{mlp_forward_fb.1} parent=1 // pred_check_branch
      %20 = sbr.rel (0) target = $region17
    $region16: #{mlp_forward_fb.1} parent=1 // pred_region
      _
    $region17: #{mlp_forward_fb.1} parent=1 // pred_fallthru
      _
    // Predicated region
    $region18: #{mlp_forward_fb.1} parent=1 // pred_check
      _
    $region19: #{mlp_forward_fb.1} parent=1 // pred_check_branch
      %22 = sbr.rel (0) target = $region21
    $region20: #{mlp_forward_fb.1} parent=1 // pred_region
      _
    $region21: #{mlp_forward_fb.1} parent=1 // pred_fallthru
      _
    // Predicated region
    $region22: #{mlp_forward_fb.1} parent=1 // pred_check
      _
    $region23: #{mlp_forward_fb.1} parent=1 // pred_check_branch
      %24 = sbr.rel (0) target = $region25
    $region24: #{mlp_forward_fb.1} parent=1 // pred_region
      _
    $region25: #{mlp_forward_fb.1} parent=1 // pred_fallthru
      _
    // Predicated region
    $region26: #{mlp_forward_fb.1} parent=1 // pred_check
      _
    $region27: #{mlp_forward_fb.1} parent=1 // pred_check_branch
      %26 = sbr.rel (0) target = $region29
    $region28: #{mlp_forward_fb.1} parent=1 // pred_region
      _
    $region29: #{mlp_forward_fb.1} parent=1 // pred_fallthru
      _
    %v27 = vld [vmem:[%s0] sm:$0xff]
    %v28 = vld [vmem:[%s0 + $0x8] sm:$0xff]
    %v29 = vld [vmem:[%s1] sm:$0xff]
    %v30 = vld [vmem:[%s1 + $0x8] sm:$0xff]
    %v31 = vld [vmem:[%s1 + $0x10] sm:$0xff]
    %v32 = vld [vmem:[%s1 + $0x18] sm:$0xff]
    %v33 = vld [vmem:[%s1 + $0x20] sm:$0xff]
    %v34 = vld [vmem:[%s1 + $0x28] sm:$0xff]
    %v35 = vld [vmem:[%s1 + $0x30] sm:$0xff]
    %v36 = vld [vmem:[%s1 + $0x38] sm:$0xff]
    %v37 = vld [vmem:[%s2] sm:$0xff]
    %v38 = vld [vmem:[%s2 + $0x8] sm:$0xff]
    %v39 = vld [vmem:[%s2 + $0x10] sm:$0xff]
    %v40 = vld [vmem:[%s2 + $0x18] sm:$0xff]
    %v41 = vld [vmem:[%s2 + $0x20] sm:$0xff]
    %v42 = vld [vmem:[%s2 + $0x28] sm:$0xff]
    %v43 = vld [vmem:[%s2 + $0x30] sm:$0xff]
    %v44 = vld [vmem:[%s2 + $0x38] sm:$0xff]
    %46 = vset.pattern.permute.xlu0 0
    %47 = vperm.xlu0 %46, %v37
    %v48 = vpop.permute.xlu0 %47
    %51 = vset.pattern.permute.xlu0 0
    %52 = vperm.xlu0 %51, %v38
    %v53 = vpop.permute.xlu0 %52
    %56 = vset.pattern.permute.xlu0 0
    %57 = vperm.xlu0 %56, %v39
    %v58 = vpop.permute.xlu0 %57
    %61 = vset.pattern.permute.xlu0 0
    %62 = vperm.xlu0 %61, %v40
    %v63 = vpop.permute.xlu0 %62
    %66 = vset.pattern.permute.xlu0 0
    %67 = vperm.xlu0 %66, %v41
    %v68 = vpop.permute.xlu0 %67
    %71 = vset.pattern.permute.xlu0 0
    %72 = vperm.xlu0 %71, %v42
    %v73 = vpop.permute.xlu0 %72
    %76 = vset.pattern.permute.xlu0 0
    %77 = vperm.xlu0 %76, %v43
    %v78 = vpop.permute.xlu0 %77
    %81 = vset.pattern.permute.xlu0 0
    %82 = vperm.xlu0 %81, %v44
    %v83 = vpop.permute.xlu0 %82
    %87 = vst [vmem:[#allocation1] ss:$2 sm:$0xff] %v27
    %s88 = scalar_lea.vmem [#allocation1], 16
    %89 = vst [vmem:[%s88] ss:$2 sm:$0xff] %v28
    %v90 = vld.sshfl [vmem:[#allocation1] sm:$0xff pattern:$0x75316420]
    %v91 = vld.sshfl [vmem:[#allocation1 + $0x8] sm:$0xff pattern:$0x75316420]
    %v92 = vld.sshfl [vmem:[#allocation1 + $0x10] sm:$0xff pattern:$0x75316420]
    %v93 = vld.sshfl [vmem:[#allocation1 + $0x18] sm:$0xff pattern:$0x75316420]
    %vm94 = vcmask 31744
    %v96 = vsel %vm94, %v29, 0
    %v99 = vsel %vm94, %v30, 0
    %v102 = vsel %vm94, %v31, 0
    %v105 = vsel %vm94, %v32, 0
    %v108 = vsel %vm94, %v33, 0
    %v111 = vsel %vm94, %v34, 0
    %v114 = vsel %vm94, %v35, 0
    %v117 = vsel %vm94, %v36, 0
    %vm119 = vcmask 1043456
    %v120 = vsel %vm119, %v90, 0
    %v122 = vsel %vm119, %v91, 0
    %v124 = vsel %vm119, %v92, 0
    %v126 = vsel %vm119, %v93, 0
    %128 = vmatpush.msra.mxu0 0.0
    %129 = vmatpush.msra.mxu0 0.0
    %130 = vmatpush.msra.mxu0 0.0
    %131 = vmatpush.msra.mxu0 0.0
    %132 = vmatpush.msra.mxu0 0.0
    %133 = vmatpush.msra.mxu0 0.0
    %134 = vmatpush.msra.mxu0 0.0
    %135 = vmatpush.msra.mxu0 0.0
    %136 = vmatpush.msra.mxu0 0.0
    %137 = vmatpush.msra.mxu0 0.0
    %138 = vmatpush.msra.mxu0 0.0
    %139 = vmatpush.msra.mxu0 0.0
    %140 = vmatpush.msra.mxu0 0.0
    %141 = vmatpush.msra.mxu0 0.0
    %142 = vmatpush.msra.mxu0 0.0
    %143 = vmatpush.msra.mxu0 %v120
    %144 = vmatmul.f32.gmra.mxu0 %v96
    %v145 = vpop.f32.mrf.mxu0
    %v146 = vadd.f32 %v48, %v145
    %147 = vmatmul.f32.gmra.mxu0 %v99
    %v148 = vpop.f32.mrf.mxu0
    %v149 = vadd.f32 %v53, %v148
    %150 = vmatmul.f32.gmra.mxu0 %v102
    %v151 = vpop.f32.mrf.mxu0
    %v152 = vadd.f32 %v58, %v151
    %153 = vmatmul.f32.gmra.mxu0 %v105
    %v154 = vpop.f32.mrf.mxu0
    %v155 = vadd.f32 %v63, %v154
    %156 = vmatmul.f32.gmra.mxu0 %v108
    %v157 = vpop.f32.mrf.mxu0
    %v158 = vadd.f32 %v68, %v157
    %159 = vmatmul.f32.gmra.mxu0 %v111
    %v160 = vpop.f32.mrf.mxu0
    %v161 = vadd.f32 %v73, %v160
    %162 = vmatmul.f32.gmra.mxu0 %v114
    %v163 = vpop.f32.mrf.mxu0
    %v164 = vadd.f32 %v78, %v163
    %165 = vmatmul.f32.gmra.mxu0 %v117
    %v166 = vpop.f32.mrf.mxu0
    %v167 = vadd.f32 %v83, %v166
    %168 = vdwg.mxu0
    %169 = vmatpush.msra.mxu0 0.0
    %170 = vmatpush.msra.mxu0 0.0
    %171 = vmatpush.msra.mxu0 0.0
    %172 = vmatpush.msra.mxu0 0.0
    %173 = vmatpush.msra.mxu0 0.0
    %174 = vmatpush.msra.mxu0 0.0
    %175 = vmatpush.msra.mxu0 0.0
    %176 = vmatpush.msra.mxu0 0.0
    %177 = vmatpush.msra.mxu0 0.0
    %178 = vmatpush.msra.mxu0 0.0
    %179 = vmatpush.msra.mxu0 0.0
    %180 = vmatpush.msra.mxu0 0.0
    %181 = vmatpush.msra.mxu0 0.0
    %182 = vmatpush.msra.mxu0 0.0
    %183 = vmatpush.msra.mxu0 0.0
    %184 = vmatpush.msra.mxu0 %v122
    %185 = vmatmul.f32.gmra.mxu0 %v96
    %v186 = vpop.f32.mrf.mxu0
    %v187 = vadd.f32 %v48, %v186
    %188 = vmatmul.f32.gmra.mxu0 %v99
    %v189 = vpop.f32.mrf.mxu0
    %v190 = vadd.f32 %v53, %v189
    %191 = vmatmul.f32.gmra.mxu0 %v102
    %v192 = vpop.f32.mrf.mxu0
    %v193 = vadd.f32 %v58, %v192
    %194 = vmatmul.f32.gmra.mxu0 %v105
    %v195 = vpop.f32.mrf.mxu0
    %v196 = vadd.f32 %v63, %v195
    %197 = vmatmul.f32.gmra.mxu0 %v108
    %v198 = vpop.f32.mrf.mxu0
    %v199 = vadd.f32 %v68, %v198
    %200 = vmatmul.f32.gmra.mxu0 %v111
    %v201 = vpop.f32.mrf.mxu0
    %v202 = vadd.f32 %v73, %v201
    %203 = vmatmul.f32.gmra.mxu0 %v114
    %v204 = vpop.f32.mrf.mxu0
    %v205 = vadd.f32 %v78, %v204
    %206 = vmatmul.f32.gmra.mxu0 %v117
    %v207 = vpop.f32.mrf.mxu0
    %v208 = vadd.f32 %v83, %v207
    %209 = vdwg.mxu0
    %210 = vmatpush.msra.mxu0 0.0
    %211 = vmatpush.msra.mxu0 0.0
    %212 = vmatpush.msra.mxu0 0.0
    %213 = vmatpush.msra.mxu0 0.0
    %214 = vmatpush.msra.mxu0 0.0
    %215 = vmatpush.msra.mxu0 0.0
    %216 = vmatpush.msra.mxu0 0.0
    %217 = vmatpush.msra.mxu0 0.0
    %218 = vmatpush.msra.mxu0 0.0
    %219 = vmatpush.msra.mxu0 0.0
    %220 = vmatpush.msra.mxu0 0.0
    %221 = vmatpush.msra.mxu0 0.0
    %222 = vmatpush.msra.mxu0 0.0
    %223 = vmatpush.msra.mxu0 0.0
    %224 = vmatpush.msra.mxu0 0.0
    %225 = vmatpush.msra.mxu0 %v124
    %226 = vmatmul.f32.gmra.mxu0 %v96
    %v227 = vpop.f32.mrf.mxu0
    %v228 = vadd.f32 %v48, %v227
    %229 = vmatmul.f32.gmra.mxu0 %v99
    %v230 = vpop.f32.mrf.mxu0
    %v231 = vadd.f32 %v53, %v230
    %232 = vmatmul.f32.gmra.mxu0 %v102
    %v233 = vpop.f32.mrf.mxu0
    %v234 = vadd.f32 %v58, %v233
    %235 = vmatmul.f32.gmra.mxu0 %v105
    %v236 = vpop.f32.mrf.mxu0
    %v237 = vadd.f32 %v63, %v236
    %238 = vmatmul.f32.gmra.mxu0 %v108
    %v239 = vpop.f32.mrf.mxu0
    %v240 = vadd.f32 %v68, %v239
    %241 = vmatmul.f32.gmra.mxu0 %v111
    %v242 = vpop.f32.mrf.mxu0
    %v243 = vadd.f32 %v73, %v242
    %244 = vmatmul.f32.gmra.mxu0 %v114
    %v245 = vpop.f32.mrf.mxu0
    %v246 = vadd.f32 %v78, %v245
    %247 = vmatmul.f32.gmra.mxu0 %v117
    %v248 = vpop.f32.mrf.mxu0
    %v249 = vadd.f32 %v83, %v248
    %250 = vdwg.mxu0
    %251 = vmatpush.msra.mxu0 0.0
    %252 = vmatpush.msra.mxu0 0.0
    %253 = vmatpush.msra.mxu0 0.0
    %254 = vmatpush.msra.mxu0 0.0
    %255 = vmatpush.msra.mxu0 0.0
    %256 = vmatpush.msra.mxu0 0.0
    %257 = vmatpush.msra.mxu0 0.0
    %258 = vmatpush.msra.mxu0 0.0
    %259 = vmatpush.msra.mxu0 0.0
    %260 = vmatpush.msra.mxu0 0.0
    %261 = vmatpush.msra.mxu0 0.0
    %262 = vmatpush.msra.mxu0 0.0
    %263 = vmatpush.msra.mxu0 0.0
    %264 = vmatpush.msra.mxu0 0.0
    %265 = vmatpush.msra.mxu0 0.0
    %266 = vmatpush.msra.mxu0 %v126
    %267 = vmatmul.f32.gmra.mxu0 %v96
    %v268 = vpop.f32.mrf.mxu0
    %v269 = vadd.f32 %v48, %v268
    %270 = vmatmul.f32.gmra.mxu0 %v99
    %v271 = vpop.f32.mrf.mxu0
    %v272 = vadd.f32 %v53, %v271
    %273 = vmatmul.f32.gmra.mxu0 %v102
    %v274 = vpop.f32.mrf.mxu0
    %v275 = vadd.f32 %v58, %v274
    %276 = vmatmul.f32.gmra.mxu0 %v105
    %v277 = vpop.f32.mrf.mxu0
    %v278 = vadd.f32 %v63, %v277
    %279 = vmatmul.f32.gmra.mxu0 %v108
    %v280 = vpop.f32.mrf.mxu0
    %v281 = vadd.f32 %v68, %v280
    %282 = vmatmul.f32.gmra.mxu0 %v111
    %v283 = vpop.f32.mrf.mxu0
    %v284 = vadd.f32 %v73, %v283
    %285 = vmatmul.f32.gmra.mxu0 %v114
    %v286 = vpop.f32.mrf.mxu0
    %v287 = vadd.f32 %v78, %v286
    %288 = vmatmul.f32.gmra.mxu0 %v117
    %v289 = vpop.f32.mrf.mxu0
    %v290 = vadd.f32 %v83, %v289
    %291 = vdwg.mxu0
    %v292 = vmax.f32 %v146, 0.0
    %v293 = vmax.f32 %v187, 0.0
    %v294 = vmax.f32 %v228, 0.0
    %v295 = vmax.f32 %v269, 0.0
    %v296 = vmax.f32 %v149, 0.0
    %v297 = vmax.f32 %v190, 0.0
    %v298 = vmax.f32 %v231, 0.0
    %v299 = vmax.f32 %v272, 0.0
    %v300 = vmax.f32 %v152, 0.0
    %v301 = vmax.f32 %v193, 0.0
    %v302 = vmax.f32 %v234, 0.0
    %v303 = vmax.f32 %v275, 0.0
    %v304 = vmax.f32 %v155, 0.0
    %v305 = vmax.f32 %v196, 0.0
    %v306 = vmax.f32 %v237, 0.0
    %v307 = vmax.f32 %v278, 0.0
    %v308 = vmax.f32 %v158, 0.0
    %v309 = vmax.f32 %v199, 0.0
    %v310 = vmax.f32 %v240, 0.0
    %v311 = vmax.f32 %v281, 0.0
    %v312 = vmax.f32 %v161, 0.0
    %v313 = vmax.f32 %v202, 0.0
    %v314 = vmax.f32 %v243, 0.0
    %v315 = vmax.f32 %v284, 0.0
    %v316 = vmax.f32 %v164, 0.0
    %v317 = vmax.f32 %v205, 0.0
    %v318 = vmax.f32 %v246, 0.0
    %v319 = vmax.f32 %v287, 0.0
    %v320 = vmax.f32 %v167, 0.0
    %v321 = vmax.f32 %v208, 0.0
    %v322 = vmax.f32 %v249, 0.0
    %v323 = vmax.f32 %v290, 0.0
    %v324 = vld [vmem:[%s3] sm:$0xff]
    %v325 = vld [vmem:[%s3 + $0x8] sm:$0xff]
    %v326 = vld [vmem:[%s3 + $0x10] sm:$0xff]
    %v327 = vld [vmem:[%s3 + $0x18] sm:$0xff]
    %v328 = vld [vmem:[%s4] sm:$0xff]
    %v329 = vld [vmem:[%s4 + $0x8] sm:$0xff]
    %v330 = vld [vmem:[%s4 + $0x10] sm:$0xff]
    %v331 = vld [vmem:[%s4 + $0x18] sm:$0xff]
    %333 = vset.pattern.permute.xlu0 0
    %334 = vperm.xlu0 %333, %v328
    %v335 = vpop.permute.xlu0 %334
    %338 = vset.pattern.permute.xlu0 0
    %339 = vperm.xlu0 %338, %v329
    %v340 = vpop.permute.xlu0 %339
    %343 = vset.pattern.permute.xlu0 0
    %344 = vperm.xlu0 %343, %v330
    %v345 = vpop.permute.xlu0 %344
    %348 = vset.pattern.permute.xlu0 0
    %349 = vperm.xlu0 %348, %v331
    %v350 = vpop.permute.xlu0 %349
    %vm352 = vcmask 523264
    %v354 = vsel %vm352, %v324, 0
    %v357 = vsel %vm352, %v325, 0
    %v360 = vsel %vm352, %v326, 0
    %v363 = vsel %vm352, %v327, 0
    %365 = vmatpush.msra.mxu0 0.0
    %366 = vmatpush.msra.mxu0 0.0
    %367 = vmatpush.msra.mxu0 0.0
    %368 = vmatpush.msra.mxu0 0.0
    %369 = vmatpush.msra.mxu0 0.0
    %370 = vmatpush.msra.mxu0 0.0
    %371 = vmatpush.msra.mxu0 0.0
    %372 = vmatpush.msra.mxu0 0.0
    %373 = vmatpush.msra.mxu0 %v320
    %374 = vmatpush.msra.mxu0 %v316
    %375 = vmatpush.msra.mxu0 %v312
    %376 = vmatpush.msra.mxu0 %v308
    %377 = vmatpush.msra.mxu0 %v304
    %378 = vmatpush.msra.mxu0 %v300
    %379 = vmatpush.msra.mxu0 %v296
    %380 = vmatpush.msra.mxu0 %v292
    %381 = vmatmul.f32.gmra.mxu0 %v354
    %v382 = vpop.f32.mrf.mxu0
    %v383 = vadd.f32 %v335, %v382
    %384 = vmatmul.f32.gmra.mxu0 %v357
    %v385 = vpop.f32.mrf.mxu0
    %v386 = vadd.f32 %v340, %v385
    %387 = vmatmul.f32.gmra.mxu0 %v360
    %v388 = vpop.f32.mrf.mxu0
    %v389 = vadd.f32 %v345, %v388
    %390 = vmatmul.f32.gmra.mxu0 %v363
    %v391 = vpop.f32.mrf.mxu0
    %v392 = vadd.f32 %v350, %v391
    %393 = vdwg.mxu0
    %394 = vmatpush.msra.mxu0 0.0
    %395 = vmatpush.msra.mxu0 0.0
    %396 = vmatpush.msra.mxu0 0.0
    %397 = vmatpush.msra.mxu0 0.0
    %398 = vmatpush.msra.mxu0 0.0
    %399 = vmatpush.msra.mxu0 0.0
    %400 = vmatpush.msra.mxu0 0.0
    %401 = vmatpush.msra.mxu0 0.0
    %402 = vmatpush.msra.mxu0 %v321
    %403 = vmatpush.msra.mxu0 %v317
    %404 = vmatpush.msra.mxu0 %v313
    %405 = vmatpush.msra.mxu0 %v309
    %406 = vmatpush.msra.mxu0 %v305
    %407 = vmatpush.msra.mxu0 %v301
    %408 = vmatpush.msra.mxu0 %v297
    %409 = vmatpush.msra.mxu0 %v293
    %410 = vmatmul.f32.gmra.mxu0 %v354
    %v411 = vpop.f32.mrf.mxu0
    %v412 = vadd.f32 %v335, %v411
    %413 = vmatmul.f32.gmra.mxu0 %v357
    %v414 = vpop.f32.mrf.mxu0
    %v415 = vadd.f32 %v340, %v414
    %416 = vmatmul.f32.gmra.mxu0 %v360
    %v417 = vpop.f32.mrf.mxu0
    %v418 = vadd.f32 %v345, %v417
    %419 = vmatmul.f32.gmra.mxu0 %v363
    %v420 = vpop.f32.mrf.mxu0
    %v421 = vadd.f32 %v350, %v420
    %422 = vdwg.mxu0
    %423 = vmatpush.msra.mxu0 0.0
    %424 = vmatpush.msra.mxu0 0.0
    %425 = vmatpush.msra.mxu0 0.0
    %426 = vmatpush.msra.mxu0 0.0
    %427 = vmatpush.msra.mxu0 0.0
    %428 = vmatpush.msra.mxu0 0.0
    %429 = vmatpush.msra.mxu0 0.0
    %430 = vmatpush.msra.mxu0 0.0
    %431 = vmatpush.msra.mxu0 %v322
    %432 = vmatpush.msra.mxu0 %v318
    %433 = vmatpush.msra.mxu0 %v314
    %434 = vmatpush.msra.mxu0 %v310
    %435 = vmatpush.msra.mxu0 %v306
    %436 = vmatpush.msra.mxu0 %v302
    %437 = vmatpush.msra.mxu0 %v298
    %438 = vmatpush.msra.mxu0 %v294
    %439 = vmatmul.f32.gmra.mxu0 %v354
    %v440 = vpop.f32.mrf.mxu0
    %v441 = vadd.f32 %v335, %v440
    %442 = vmatmul.f32.gmra.mxu0 %v357
    %v443 = vpop.f32.mrf.mxu0
    %v444 = vadd.f32 %v340, %v443
    %445 = vmatmul.f32.gmra.mxu0 %v360
    %v446 = vpop.f32.mrf.mxu0
    %v447 = vadd.f32 %v345, %v446
    %448 = vmatmul.f32.gmra.mxu0 %v363
    %v449 = vpop.f32.mrf.mxu0
    %v450 = vadd.f32 %v350, %v449
    %451 = vdwg.mxu0
    %452 = vmatpush.msra.mxu0 0.0
    %453 = vmatpush.msra.mxu0 0.0
    %454 = vmatpush.msra.mxu0 0.0
    %455 = vmatpush.msra.mxu0 0.0
    %456 = vmatpush.msra.mxu0 0.0
    %457 = vmatpush.msra.mxu0 0.0
    %458 = vmatpush.msra.mxu0 0.0
    %459 = vmatpush.msra.mxu0 0.0
    %460 = vmatpush.msra.mxu0 %v323
    %461 = vmatpush.msra.mxu0 %v319
    %462 = vmatpush.msra.mxu0 %v315
    %463 = vmatpush.msra.mxu0 %v311
    %464 = vmatpush.msra.mxu0 %v307
    %465 = vmatpush.msra.mxu0 %v303
    %466 = vmatpush.msra.mxu0 %v299
    %467 = vmatpush.msra.mxu0 %v295
    %468 = vmatmul.f32.gmra.mxu0 %v354
    %v469 = vpop.f32.mrf.mxu0
    %v470 = vadd.f32 %v335, %v469
    %471 = vmatmul.f32.gmra.mxu0 %v357
    %v472 = vpop.f32.mrf.mxu0
    %v473 = vadd.f32 %v340, %v472
    %474 = vmatmul.f32.gmra.mxu0 %v360
    %v475 = vpop.f32.mrf.mxu0
    %v476 = vadd.f32 %v345, %v475
    %477 = vmatmul.f32.gmra.mxu0 %v363
    %v478 = vpop.f32.mrf.mxu0
    %v479 = vadd.f32 %v350, %v478
    %480 = vdwg.mxu0
    %v481 = vmax.f32 %v383, 0.0
    %v482 = vmax.f32 %v412, 0.0
    %v483 = vmax.f32 %v441, 0.0
    %v484 = vmax.f32 %v470, 0.0
    %v485 = vmax.f32 %v386, 0.0
    %v486 = vmax.f32 %v415, 0.0
    %v487 = vmax.f32 %v444, 0.0
    %v488 = vmax.f32 %v473, 0.0
    %v489 = vmax.f32 %v389, 0.0
    %v490 = vmax.f32 %v418, 0.0
    %v491 = vmax.f32 %v447, 0.0
    %v492 = vmax.f32 %v476, 0.0
    %v493 = vmax.f32 %v392, 0.0
    %v494 = vmax.f32 %v421, 0.0
    %v495 = vmax.f32 %v450, 0.0
    %v496 = vmax.f32 %v479, 0.0
    %v497 = vld [vmem:[%s5] sm:$0x7]
    %v498 = vld [vmem:[%s6] sm:$0x7]
    %500 = vset.pattern.permute.xlu0 0
    %501 = vperm.xlu0 %500, %v498
    %v502 = vpop.permute.xlu0 %501
    %vm504 = vcmask 261120
    %v506 = vsel %vm504, %v497, 0
    %508 = vmatpush.msra.mxu0 0.0
    %509 = vmatpush.msra.mxu0 0.0
    %510 = vmatpush.msra.mxu0 0.0
    %511 = vmatpush.msra.mxu0 0.0
    %512 = vmatpush.msra.mxu0 0.0
    %513 = vmatpush.msra.mxu0 0.0
    %514 = vmatpush.msra.mxu0 0.0
    %515 = vmatpush.msra.mxu0 0.0
    %516 = vmatpush.msra.mxu0 0.0
    %517 = vmatpush.msra.mxu0 0.0
    %518 = vmatpush.msra.mxu0 0.0
    %519 = vmatpush.msra.mxu0 0.0
    %520 = vmatpush.msra.mxu0 %v493
    %521 = vmatpush.msra.mxu0 %v489
    %522 = vmatpush.msra.mxu0 %v485
    %523 = vmatpush.msra.mxu0 %v481
    %524 = vmatmul.f32.gmra.mxu0 %v506
    %v525 = vpop.f32.mrf.mxu0
    %v526 = vadd.f32 %v502, %v525
    %527 = vdwg.mxu0
    %528 = vmatpush.msra.mxu0 0.0
    %529 = vmatpush.msra.mxu0 0.0
    %530 = vmatpush.msra.mxu0 0.0
    %531 = vmatpush.msra.mxu0 0.0
    %532 = vmatpush.msra.mxu0 0.0
    %533 = vmatpush.msra.mxu0 0.0
    %534 = vmatpush.msra.mxu0 0.0
    %535 = vmatpush.msra.mxu0 0.0
    %536 = vmatpush.msra.mxu0 0.0
    %537 = vmatpush.msra.mxu0 0.0
    %538 = vmatpush.msra.mxu0 0.0
    %539 = vmatpush.msra.mxu0 0.0
    %540 = vmatpush.msra.mxu0 %v494
    %541 = vmatpush.msra.mxu0 %v490
    %542 = vmatpush.msra.mxu0 %v486
    %543 = vmatpush.msra.mxu0 %v482
    %544 = vmatmul.f32.gmra.mxu0 %v506
    %v545 = vpop.f32.mrf.mxu0
    %v546 = vadd.f32 %v502, %v545
    %547 = vdwg.mxu0
    %548 = vmatpush.msra.mxu0 0.0
    %549 = vmatpush.msra.mxu0 0.0
    %550 = vmatpush.msra.mxu0 0.0
    %551 = vmatpush.msra.mxu0 0.0
    %552 = vmatpush.msra.mxu0 0.0
    %553 = vmatpush.msra.mxu0 0.0
    %554 = vmatpush.msra.mxu0 0.0
    %555 = vmatpush.msra.mxu0 0.0
    %556 = vmatpush.msra.mxu0 0.0
    %557 = vmatpush.msra.mxu0 0.0
    %558 = vmatpush.msra.mxu0 0.0
    %559 = vmatpush.msra.mxu0 0.0
    %560 = vmatpush.msra.mxu0 %v495
    %561 = vmatpush.msra.mxu0 %v491
    %562 = vmatpush.msra.mxu0 %v487
    %563 = vmatpush.msra.mxu0 %v483
    %564 = vmatmul.f32.gmra.mxu0 %v506
    %v565 = vpop.f32.mrf.mxu0
    %v566 = vadd.f32 %v502, %v565
    %567 = vdwg.mxu0
    %568 = vmatpush.msra.mxu0 0.0
    %569 = vmatpush.msra.mxu0 0.0
    %570 = vmatpush.msra.mxu0 0.0
    %571 = vmatpush.msra.mxu0 0.0
    %572 = vmatpush.msra.mxu0 0.0
    %573 = vmatpush.msra.mxu0 0.0
    %574 = vmatpush.msra.mxu0 0.0
    %575 = vmatpush.msra.mxu0 0.0
    %576 = vmatpush.msra.mxu0 0.0
    %577 = vmatpush.msra.mxu0 0.0
    %578 = vmatpush.msra.mxu0 0.0
    %579 = vmatpush.msra.mxu0 0.0
    %580 = vmatpush.msra.mxu0 %v496
    %581 = vmatpush.msra.mxu0 %v492
    %582 = vmatpush.msra.mxu0 %v488
    %583 = vmatpush.msra.mxu0 %v484
    %584 = vmatmul.f32.gmra.mxu0 %v506
    %v585 = vpop.f32.mrf.mxu0
    %v586 = vadd.f32 %v502, %v585
    %587 = vdwg.mxu0
    %v592 = vrot.slane %v546, 4
    %v593 = vrot.slane %v586, 4
    %v594 = vsel %vm119, %v526, %v592
    %v595 = vsel %vm119, %v566, %v593
    %598 = vst [vmem:[#allocation2] sm:$0x77] %v594
    %599 = vst [vmem:[#allocation2 + $0x8] sm:$0x77] %v595
    // Predicated region
    $region30: #{mlp_forward_fb.1} parent=1 // pred_check
      _
    $region31: #{mlp_forward_fb.1} parent=1 // pred_check_branch
      %601 = sbr.rel (0) target = $region33
    $region32: #{mlp_forward_fb.1} parent=1 // pred_region
      %603 = vsyncadd [#allocation3], 0
      %s605 = sshll.u32 [#allocation2], 4
      %s606 = int_to_ptr.vmem [resolvable:$true] %s605
      %s607 = sshll.u32 %s7, 4
      %s608 = int_to_ptr.hbm [resolvable:$true] %s607
      %610 = dma.vmem_to_hbm [thread:$0]  %s606, 256, %s608, [#allocation3]
    $region33: #{mlp_forward_fb.1} parent=1 // pred_fallthru
      _
    // Predicated region
    $region34: #{mlp_forward_fb.1} parent=1 // pred_check
      _
    $region35: #{mlp_forward_fb.1} parent=1 // pred_check_branch
      %612 = sbr.rel (0) target = $region37
    $region36: #{mlp_forward_fb.1} parent=1 // pred_region
      %614 = dma.done [#allocation3], 256
    $region37: #{mlp_forward_fb.1} parent=1 // pred_fallthru
      _
    %615 = vsyncpa [#allocation3], 1

</llo_original>
